<compile_context>
chip_gen: v7x
topology: tpu7x:2x2x1
jax: 0.10.0
libtpu: 0.0.40
codegen_flags: <defaults>
</compile_context>

<pallas_src>
from functools import partial

import jax
import jax.numpy as jnp
from jax.experimental import pallas as pl
from jax.experimental.pallas import tpu as pltpu

_PACK = 8  # batch rows packed per 128-lane row (8 f32 sublanes)


def actor_kernel(x_ref, w1_ref, b1_ref, w2_ref, b2_ref, w3_ref, b3_ref, o_ref):
    # x arrives as f32 (no wrapper cast pass); VPU cast to bf16 is free.
    x = x_ref[...].astype(jnp.bfloat16)
    # Layer 1: Linear (bf16 operands, f32 acc) + ReLU (f32)
    h1 = jnp.dot(x, w1_ref[...], preferred_element_type=jnp.float32)
    h1 = jnp.maximum(h1 + b1_ref[...], 0.0)
    # Layer 2: Linear + ReLU
    h2 = jnp.dot(h1.astype(jnp.bfloat16), w2_ref[...],
                 preferred_element_type=jnp.float32)
    h2 = jnp.maximum(h2 + b2_ref[...], 0.0)
    # Layer 3: Linear + Tanh, then * 2 (DDPG action scaling)
    h3 = jnp.dot(h2.astype(jnp.bfloat16), w3_ref[...],
                 preferred_element_type=jnp.float32)
    o_ref[...] = (jnp.tanh(h3 + b3_ref[...]) * 2.0).astype(o_ref.dtype)


def _round_up(a, m):
    return (a + m - 1) // m * m


def _pack_params(params):
    """Replicate weights block-diagonally so 8 batch rows share one lane-row."""
    eye = jnp.eye(_PACK, dtype=jnp.float32)

    def bd(w):  # [in, out] -> block-diag [8*in, 8*out], bf16 MXU operand
        return jnp.kron(eye, w.astype(jnp.float32)).astype(jnp.bfloat16)

    def tb(b):  # [1, out] -> [1, 8*out], f32 epilogue operand
        return jnp.tile(b.astype(jnp.float32), (1, _PACK))

    return (bd(params["w1"]), tb(params["b1"]),
            bd(params["w2"]), tb(params["b2"]),
            bd(params["w3"]), tb(params["b3"]))


@partial(jax.jit, static_argnames=("tile_b",))
def actor_forward(x, params, tile_b=8192):
    """x: [B, state_dim] float32; params: dict of f32 weights/biases.

    Streams the packed batch over a 1-D grid; (tiny) packed weights stay
    VMEM-resident via constant index_maps.
    """
    B, S = x.shape
    A = params["w3"].shape[1]

    w1p, b1p, w2p, b2p, w3p, b3p = _pack_params(params)

    # --- lane-dense repack: 8 batch rows -> one 128-lane row (free reshape) ---
    b8 = _round_up(B, _PACK)
    if b8 != B:
        # Rare tail pad only (B % 8 != 0); padded rows are sliced off below.
        x = jnp.pad(x, ((0, b8 - B), (0, 0)))
    xp = x.reshape(b8 // _PACK, _PACK * S)
    Bp = b8 // _PACK  # packed rows

    # --- tile choice (in packed rows) ---
    # Always a multiple of 8 sublanes (or the full packed batch); large enough
    # to amortize per-step overhead; >= 2 grid steps for big batches so
    # "parallel" can shard across v7x's 2 TensorCores; capped for VMEM.
    cap_p = max(8, (min(int(tile_b), 32768) // _PACK) // 8 * 8)
    if Bp <= cap_p:
        tile_p = _round_up(pl.cdiv(Bp, 2), 8) if Bp > 512 else Bp
    else:
        tile_p = cap_p
    grid = (pl.cdiv(Bp, tile_p),)  # boundary block (if any) is masked by Pallas

    def full(a):
        # Full-array block, constant index -> loaded once, resident in VMEM.
        return pl.BlockSpec(a.shape, lambda i: (0, 0))

    out_p = pl.pallas_call(
        actor_kernel,
        out_shape=jax.ShapeDtypeStruct((Bp, _PACK * A), jnp.float32),
        grid=grid,
        in_specs=[
            pl.BlockSpec((tile_p, _PACK * S), lambda i: (i, 0)),  # packed x
            full(w1p), full(b1p),
            full(w2p), full(b2p),
            full(w3p), full(b3p),
        ],
        out_specs=pl.BlockSpec((tile_p, _PACK * A), lambda i: (i, 0)),
        compiler_params=pltpu.CompilerParams(
            dimension_semantics=("parallel",),
            vmem_limit_bytes=32 * 1024 * 1024),
    )(xp, w1p, b1p, w2p, b2p, w3p, b3p)

    # Unpack: [Bp, 8*A] -> [b8, A] is a free contiguous reshape.
    return out_p.reshape(b8, A)[:B]


def init_params(key, state_dim, action_dim, hidden=24):
    """PyTorch-style init: U(-1/sqrt(fan_in), 1/sqrt(fan_in))."""
    ks = jax.random.split(key, 6)

    def linear(kw, kb, fan_in, fan_out):
        bound = 1.0 / jnp.sqrt(fan_in)
        w = jax.random.uniform(kw, (fan_in, fan_out), jnp.float32, -bound, bound)
        b = jax.random.uniform(kb, (1, fan_out), jnp.float32, -bound, bound)
        return w, b

    w1, b1 = linear(ks[0], ks[1], state_dim, hidden)
    w2, b2 = linear(ks[2], ks[3], hidden, hidden)
    w3, b3 = linear(ks[4], ks[5], hidden, action_dim)
    return {"w1": w1, "b1": b1, "w2": w2, "b2": b2, "w3": w3, "b3": b3}


def actor_reference_bf16(x, p):
    """Same mixed-precision recipe as the kernel (bf16 operands, f32 acc)."""
    bf, f = jnp.bfloat16, jnp.float32
    h1 = jnp.maximum(
        jnp.dot(x.astype(bf), p["w1"].astype(bf), preferred_element_type=f)
        + p["b1"], 0.0)
    h2 = jnp.maximum(
        jnp.dot(h1.astype(bf), p["w2"].astype(bf), preferred_element_type=f)
        + p["b2"], 0.0)
    h3 = jnp.dot(h2.astype(bf), p["w3"].astype(bf), preferred_element_type=f)
    return jnp.tanh(h3 + p["b3"]) * 2.0


def actor_reference_f32(x, p):
    h1 = jnp.maximum(x @ p["w1"] + p["b1"], 0.0)
    h2 = jnp.maximum(h1 @ p["w2"] + p["b2"], 0.0)
    return jnp.tanh(h2 @ p["w3"] + p["b3"]) * 2.0


# TODO(synk): torch.optim.Adam (training side) has no forward-pass equivalent
# and is intentionally not implemented.

if __name__ == "__main__":
    key = jax.random.PRNGKey(0)
    k_x, k_p, k_x2 = jax.random.split(key, 3)

    # Small shapes consistent with the module.
    batch, state_dim, action_dim = 8, 16, 4
    x = jax.random.normal(k_x, (batch, state_dim), jnp.float32)
    params = init_params(k_p, state_dim, action_dim)

    out = jax.block_until_ready(actor_forward(x, params))
    assert out.shape == (batch, action_dim)
    assert jnp.allclose(out, actor_reference_bf16(x, params),
                        atol=1e-4, rtol=1e-4), "mismatch vs bf16 reference"
    assert jnp.allclose(out, actor_reference_f32(x, params),
                        atol=5e-2, rtol=5e-2), "mismatch vs f32 reference"

    # Second check: B % 8 != 0 and B % tile != 0 -> exercises the tail pad,
    # a multi-step grid, and Pallas boundary-block store masking.
    batch2 = 1001
    x2 = jax.random.normal(k_x2, (batch2, state_dim), jnp.float32)
    out2 = jax.block_until_ready(actor_forward(x2, params, tile_b=256))
    assert out2.shape == (batch2, action_dim)
    assert jnp.allclose(out2, actor_reference_bf16(x2, params),
                        atol=1e-4, rtol=1e-4), "mismatch vs bf16 reference (tiled)"

    print("KERNEL_OK")
</pallas_src>

<mosaic_0001>
module attributes {stable_mosaic.version = 11 : i64} {
  func.func @actor_kernel(%arg0: i32, %arg1: memref<1x128xf32, #tpu.memory_space<vmem>>, %arg2: memref<128x192xbf16, #tpu.memory_space<vmem>>, %arg3: memref<1x192xf32, #tpu.memory_space<vmem>>, %arg4: memref<192x192xbf16, #tpu.memory_space<vmem>>, %arg5: memref<1x192xf32, #tpu.memory_space<vmem>>, %arg6: memref<192x32xbf16, #tpu.memory_space<vmem>>, %arg7: memref<1x32xf32, #tpu.memory_space<vmem>>, %arg8: memref<1x32xf32, #tpu.memory_space<vmem>>) attributes {dimension_semantics = [#tpu.dimension_semantics<parallel>], iteration_bounds = array<i64: 1>, scalar_prefetch = 0 : i64, scratch_operands = 0 : i64, tpu.core_type = #tpu.core_type<tc>, window_params = [{transform_indices = @transform_0, window_bounds = array<i64: 1, 128>}, {pipeline_mode = #tpu.pipeline_mode<synchronous>, transform_indices = @transform_1, window_bounds = array<i64: 128, 192>}, {pipeline_mode = #tpu.pipeline_mode<synchronous>, transform_indices = @transform_2, window_bounds = array<i64: 1, 192>}, {pipeline_mode = #tpu.pipeline_mode<synchronous>, transform_indices = @transform_3, window_bounds = array<i64: 192, 192>}, {pipeline_mode = #tpu.pipeline_mode<synchronous>, transform_indices = @transform_4, window_bounds = array<i64: 1, 192>}, {pipeline_mode = #tpu.pipeline_mode<synchronous>, transform_indices = @transform_5, window_bounds = array<i64: 192, 32>}, {pipeline_mode = #tpu.pipeline_mode<synchronous>, transform_indices = @transform_6, window_bounds = array<i64: 1, 32>}, {transform_indices = @transform_7, window_bounds = array<i64: 1, 32>}]} {
    %c0 = arith.constant 0 : index
    %c0_0 = arith.constant 0 : index
    %0 = vector.load %arg1[%c0, %c0_0] : memref<1x128xf32, #tpu.memory_space<vmem>>, vector<1x128xf32>
    %1 = arith.truncf %0 : vector<1x128xf32> to vector<1x128xbf16>
    %c0_1 = arith.constant 0 : index
    %c0_2 = arith.constant 0 : index
    %2 = vector.load %arg2[%c0_1, %c0_2] : memref<128x192xbf16, #tpu.memory_space<vmem>>, vector<128x192xbf16>
    %cst = arith.constant dense<0.000000e+00> : vector<1x192xf32>
    %3 = tpu.matmul %1, %2, %cst {dimension_numbers = #tpu.dot_dimension_numbers<[1], [0], [0], [1], [0, 0, 1, 1], [], []>} : vector<1x128xbf16>, vector<128x192xbf16>, vector<1x192xf32> -> vector<1x192xf32>
    %c0_3 = arith.constant 0 : index
    %c0_4 = arith.constant 0 : index
    %4 = vector.load %arg3[%c0_3, %c0_4] : memref<1x192xf32, #tpu.memory_space<vmem>>, vector<1x192xf32>
    %5 = arith.addf %3, %4 : vector<1x192xf32>
    %cst_5 = arith.constant 0.000000e+00 : f32
    %6 = vector.broadcast %cst_5 : f32 to vector<1x192xf32>
    %7 = arith.maximumf %5, %6 : vector<1x192xf32>
    %8 = arith.truncf %7 : vector<1x192xf32> to vector<1x192xbf16>
    %c0_6 = arith.constant 0 : index
    %c0_7 = arith.constant 0 : index
    %9 = vector.load %arg4[%c0_6, %c0_7] : memref<192x192xbf16, #tpu.memory_space<vmem>>, vector<192x192xbf16>
    %cst_8 = arith.constant dense<0.000000e+00> : vector<1x192xf32>
    %10 = tpu.matmul %8, %9, %cst_8 {dimension_numbers = #tpu.dot_dimension_numbers<[1], [0], [0], [1], [0, 0, 1, 1], [], []>} : vector<1x192xbf16>, vector<192x192xbf16>, vector<1x192xf32> -> vector<1x192xf32>
    %c0_9 = arith.constant 0 : index
    %c0_10 = arith.constant 0 : index
    %11 = vector.load %arg5[%c0_9, %c0_10] : memref<1x192xf32, #tpu.memory_space<vmem>>, vector<1x192xf32>
    %12 = arith.addf %10, %11 : vector<1x192xf32>
    %cst_11 = arith.constant 0.000000e+00 : f32
    %13 = vector.broadcast %cst_11 : f32 to vector<1x192xf32>
    %14 = arith.maximumf %12, %13 : vector<1x192xf32>
    %15 = arith.truncf %14 : vector<1x192xf32> to vector<1x192xbf16>
    %c0_12 = arith.constant 0 : index
    %c0_13 = arith.constant 0 : index
    %16 = vector.load %arg6[%c0_12, %c0_13] : memref<192x32xbf16, #tpu.memory_space<vmem>>, vector<192x32xbf16>
    %cst_14 = arith.constant dense<0.000000e+00> : vector<1x32xf32>
    %17 = tpu.matmul %15, %16, %cst_14 {dimension_numbers = #tpu.dot_dimension_numbers<[1], [0], [0], [1], [0, 0, 1, 1], [], []>} : vector<1x192xbf16>, vector<192x32xbf16>, vector<1x32xf32> -> vector<1x32xf32>
    %c0_15 = arith.constant 0 : index
    %c0_16 = arith.constant 0 : index
    %18 = vector.load %arg7[%c0_15, %c0_16] : memref<1x32xf32, #tpu.memory_space<vmem>>, vector<1x32xf32>
    %19 = arith.addf %17, %18 : vector<1x32xf32>
    %20 = math.tanh %19 : vector<1x32xf32>
    %cst_17 = arith.constant 2.000000e+00 : f32
    %21 = vector.broadcast %cst_17 : f32 to vector<1x32xf32>
    %22 = arith.mulf %20, %21 : vector<1x32xf32>
    %c0_18 = arith.constant 0 : index
    %c0_19 = arith.constant 0 : index
    %23 = vector.load %arg8[%c0_18, %c0_19] : memref<1x32xf32, #tpu.memory_space<vmem>>, vector<1x32xf32>
    tpu.vector_store %arg8[%c0_18, %c0_19], %22 {strides = array<i32>} : memref<1x32xf32, #tpu.memory_space<vmem>>, vector<1x32xf32>,
    return
  }
  func.func @transform_0(%arg0: i32) -> (i32, i32) {
    %c0_i32 = arith.constant 0 : i32
    %c0_i32_0 = arith.constant 0 : i32
    return %arg0, %c0_i32 : i32, i32
  }
  func.func @transform_1(%arg0: i32) -> (i32, i32) {
    %c0_i32 = arith.constant 0 : i32
    %c0_i32_0 = arith.constant 0 : i32
    %c0_i32_1 = arith.constant 0 : i32
    return %c0_i32, %c0_i32_0 : i32, i32
  }
  func.func @transform_2(%arg0: i32) -> (i32, i32) {
    %c0_i32 = arith.constant 0 : i32
    %c0_i32_0 = arith.constant 0 : i32
    %c0_i32_1 = arith.constant 0 : i32
    return %c0_i32, %c0_i32_0 : i32, i32
  }
  func.func @transform_3(%arg0: i32) -> (i32, i32) {
    %c0_i32 = arith.constant 0 : i32
    %c0_i32_0 = arith.constant 0 : i32
    %c0_i32_1 = arith.constant 0 : i32
    return %c0_i32, %c0_i32_0 : i32, i32
  }
  func.func @transform_4(%arg0: i32) -> (i32, i32) {
    %c0_i32 = arith.constant 0 : i32
    %c0_i32_0 = arith.constant 0 : i32
    %c0_i32_1 = arith.constant 0 : i32
    return %c0_i32, %c0_i32_0 : i32, i32
  }
  func.func @transform_5(%arg0: i32) -> (i32, i32) {
    %c0_i32 = arith.constant 0 : i32
    %c0_i32_0 = arith.constant 0 : i32
    %c0_i32_1 = arith.constant 0 : i32
    return %c0_i32, %c0_i32_0 : i32, i32
  }
  func.func @transform_6(%arg0: i32) -> (i32, i32) {
    %c0_i32 = arith.constant 0 : i32
    %c0_i32_0 = arith.constant 0 : i32
    %c0_i32_1 = arith.constant 0 : i32
    return %c0_i32, %c0_i32_0 : i32, i32
  }
  func.func @transform_7(%arg0: i32) -> (i32, i32) {
    %c0_i32 = arith.constant 0 : i32
    %c0_i32_0 = arith.constant 0 : i32
    return %arg0, %c0_i32 : i32, i32
  }
}

</mosaic_0001>

<llo_original>
// kernel: actor_forward.1
$region0: #{actor_forward.1}
  #allocation0 [shape = 'u32[]', space=smem, size = 0x4, offset = 0x4, fixed_abs, tag = 'smem constant byte address 0x4 - core index']
  #allocation1 [shape = 'u32[144,128]{1,0:T(1,128)}', space=vmem, size = 0x12000, scoped, tag = 'internal scratch']
  %s0 = inlined_call_operand.vmem [shape: f32[1,128], index: 0, kind: input, shape index: {}]
  %s1 = inlined_call_operand.vmem [shape: bf16[128,192], index: 1, kind: input, shape index: {}]
  %s2 = inlined_call_operand.vmem [shape: f32[1,192], index: 2, kind: input, shape index: {}]
  %s3 = inlined_call_operand.vmem [shape: bf16[192,192], index: 3, kind: input, shape index: {}]
  %s4 = inlined_call_operand.vmem [shape: f32[1,192], index: 4, kind: input, shape index: {}]
  %s5 = inlined_call_operand.vmem [shape: bf16[192,32], index: 5, kind: input, shape index: {}]
  %s6 = inlined_call_operand.vmem [shape: f32[1,32], index: 6, kind: input, shape index: {}]
  %s7 = inlined_call_operand.vmem [shape: f32[1,32], index: 7, kind: output, shape index: {}]
  %s8 = sld [smem:[#allocation0]]
  $region38: #{actor_forward.1} parent=0
    _
  %s10 = ssub.s32 1, %s8
  %s11 = scalar_select 0, %s10, %s8
  // Predicated region
  $region2: #{actor_forward.1} parent=0 // pred_check
    _
  $region3: #{actor_forward.1} parent=0 // pred_check_branch
    %13 = sbr.rel (0) target = $region5
  $region4: #{actor_forward.1} parent=0 // pred_region
    _
  $region5: #{actor_forward.1} parent=0 // pred_fallthru
    _
  // Predicated region
  $region6: #{actor_forward.1} parent=0 // pred_check
    _
  $region7: #{actor_forward.1} parent=0 // pred_check_branch
    %15 = sbr.rel (0) target = $region9
  $region8: #{actor_forward.1} parent=0 // pred_region
    _
  $region9: #{actor_forward.1} parent=0 // pred_fallthru
    _
  // Predicated region
  $region10: #{actor_forward.1} parent=0 // pred_check
    _
  $region11: #{actor_forward.1} parent=0 // pred_check_branch
    %17 = sbr.rel (0) target = $region13
  $region12: #{actor_forward.1} parent=0 // pred_region
    _
  $region13: #{actor_forward.1} parent=0 // pred_fallthru
    _
  // Predicated region
  $region14: #{actor_forward.1} parent=0 // pred_check
    _
  $region15: #{actor_forward.1} parent=0 // pred_check_branch
    %19 = sbr.rel (0) target = $region17
  $region16: #{actor_forward.1} parent=0 // pred_region
    _
  $region17: #{actor_forward.1} parent=0 // pred_fallthru
    _
  // Predicated region
  $region18: #{actor_forward.1} parent=0 // pred_check
    _
  $region19: #{actor_forward.1} parent=0 // pred_check_branch
    %21 = sbr.rel (0) target = $region21
  $region20: #{actor_forward.1} parent=0 // pred_region
    _
  $region21: #{actor_forward.1} parent=0 // pred_fallthru
    _
  // Predicated region
  $region22: #{actor_forward.1} parent=0 // pred_check
    _
  $region23: #{actor_forward.1} parent=0 // pred_check_branch
    %23 = sbr.rel (0) target = $region25
  $region24: #{actor_forward.1} parent=0 // pred_region
    _
  $region25: #{actor_forward.1} parent=0 // pred_fallthru
    _
  // Predicated region
  $region26: #{actor_forward.1} parent=0 // pred_check
    _
  $region27: #{actor_forward.1} parent=0 // pred_check_branch
    %25 = sbr.rel (0) target = $region29
  $region28: #{actor_forward.1} parent=0 // pred_region
    _
  $region29: #{actor_forward.1} parent=0 // pred_fallthru
    _
  %v27 = vld [vmem:[%s0] sm:$0x1]
  %v28 = vpack.c.bf16 %v27, %v27
  %v29 = vld [vmem:[%s1] sm:$0xff]
  %v30 = vld [vmem:[%s1 + $0x8] sm:$0xff]
  %v31 = vld [vmem:[%s1 + $0x10] sm:$0xff]
  %v32 = vld [vmem:[%s1 + $0x18] sm:$0xff]
  %v33 = vld [vmem:[%s1 + $0x20] sm:$0xff]
  %v34 = vld [vmem:[%s1 + $0x28] sm:$0xff]
  %v35 = vld [vmem:[%s1 + $0x30] sm:$0xff]
  %v36 = vld [vmem:[%s1 + $0x38] sm:$0xff]
  %v37 = vld [vmem:[%s1 + $0x40] sm:$0xff]
  %v38 = vld [vmem:[%s1 + $0x48] sm:$0xff]
  %v39 = vld [vmem:[%s1 + $0x50] sm:$0xff]
  %v40 = vld [vmem:[%s1 + $0x58] sm:$0xff]
  %v41 = vld [vmem:[%s1 + $0x60] sm:$0xff]
  %v42 = vld [vmem:[%s1 + $0x68] sm:$0xff]
  %v43 = vld [vmem:[%s1 + $0x70] sm:$0xff]
  %v44 = vld [vmem:[%s1 + $0x78] sm:$0xff]
  %v45 = vld [vmem:[%s2] sm:$0x3]
  %v62 = vunpack.c.l.b16 %v29
  %v63 = vunpack.c.h.b16 %v29
  %v64 = vunpack.c.l.b16 %v30
  %v65 = vunpack.c.h.b16 %v30
  %v66 = vunpack.c.l.b16 %v31
  %v67 = vunpack.c.h.b16 %v31
  %v68 = vunpack.c.l.b16 %v32
  %v69 = vunpack.c.h.b16 %v32
  %v70 = vunpack.c.l.b16 %v33
  %v71 = vunpack.c.h.b16 %v33
  %v72 = vunpack.c.l.b16 %v34
  %v73 = vunpack.c.h.b16 %v34
  %v74 = vunpack.c.l.b16 %v35
  %v75 = vunpack.c.h.b16 %v35
  %v76 = vunpack.c.l.b16 %v36
  %v77 = vunpack.c.h.b16 %v36
  %v78 = vunpack.c.l.b16 %v37
  %v79 = vunpack.c.h.b16 %v37
  %v80 = vunpack.c.l.b16 %v38
  %v81 = vunpack.c.h.b16 %v38
  %v82 = vunpack.c.l.b16 %v39
  %v83 = vunpack.c.h.b16 %v39
  %v84 = vunpack.c.l.b16 %v40
  %v85 = vunpack.c.h.b16 %v40
  %v86 = vunpack.c.l.b16 %v41
  %v87 = vunpack.c.h.b16 %v41
  %v88 = vunpack.c.l.b16 %v42
  %v89 = vunpack.c.h.b16 %v42
  %v90 = vunpack.c.l.b16 %v43
  %v91 = vunpack.c.h.b16 %v43
  %v92 = vunpack.c.l.b16 %v44
  %v93 = vunpack.c.h.b16 %v44
  %v94 = vpack.c.b16 %v64, %v62
  %v95 = vpack.c.b16 %v65, %v63
  %v96 = vpack.c.b16 %v68, %v66
  %v97 = vpack.c.b16 %v69, %v67
  %v98 = vpack.c.b16 %v72, %v70
  %v99 = vpack.c.b16 %v73, %v71
  %v100 = vpack.c.b16 %v76, %v74
  %v101 = vpack.c.b16 %v77, %v75
  %v102 = vpack.c.b16 %v80, %v78
  %v103 = vpack.c.b16 %v81, %v79
  %v104 = vpack.c.b16 %v84, %v82
  %v105 = vpack.c.b16 %v85, %v83
  %v106 = vpack.c.b16 %v88, %v86
  %v107 = vpack.c.b16 %v89, %v87
  %v108 = vpack.c.b16 %v92, %v90
  %v109 = vpack.c.b16 %v93, %v91
  %v127 = vlaneseq
  %v128 = vshrl.u32 %v127, 7
  %v129 = vsub.s32 0, %v128
  %v130 = vrot.slane %v45, %v129
  %v131 = vlaneseq
  %v132 = vshrl.u32 %v131, 7
  %v133 = vsub.s32 1, %v132
  %v134 = vrot.slane %v45, %v133
  %137 = vmatprep.subr.bf16.mxu0 %v95
  %138 = vmatpush1.bf16.msra.mxu0 %v94
  %139 = vmatprep.subr.bf16.mxu0 %v97
  %140 = vmatpush1.bf16.msra.mxu0 %v96
  %141 = vmatprep.subr.bf16.mxu0 %v99
  %142 = vmatpush1.bf16.msra.mxu0 %v98
  %143 = vmatprep.subr.bf16.mxu0 %v101
  %144 = vmatpush1.bf16.msra.mxu0 %v100
  %145 = vmatprep.subr.bf16.mxu0 %v103
  %146 = vmatpush1.bf16.msra.mxu0 %v102
  %147 = vmatprep.subr.bf16.mxu0 %v105
  %148 = vmatpush1.bf16.msra.mxu0 %v104
  %149 = vmatprep.subr.bf16.mxu0 %v107
  %150 = vmatpush1.bf16.msra.mxu0 %v106
  %151 = vmatprep.subr.bf16.mxu0 %v109
  %152 = vmatpush1.bf16.msra.mxu0 %v108
  %153 = vmatprep.subr.bf16.mxu0 0
  %154 = vmatpush1.bf16.msra.mxu0 0
  %155 = vmatprep.subr.bf16.mxu0 0
  %156 = vmatpush1.bf16.msra.mxu0 0
  %157 = vmatprep.subr.bf16.mxu0 0
  %158 = vmatpush1.bf16.msra.mxu0 0
  %159 = vmatprep.subr.bf16.mxu0 0
  %160 = vmatpush1.bf16.msra.mxu0 0
  %161 = vmatprep.subr.bf16.mxu0 0
  %162 = vmatpush1.bf16.msra.mxu0 0
  %163 = vmatprep.subr.bf16.mxu0 0
  %164 = vmatpush1.bf16.msra.mxu0 0
  %165 = vmatprep.subr.bf16.mxu0 0
  %166 = vmatpush1.bf16.msra.mxu0 0
  %167 = vmatprep.subr.bf16.mxu0 0
  %168 = vmatpush1.bf16.msra.mxu0 0
  %169 = vmatprep.mubr.bf16.mxu0 0
  %170 = vmatmul.mubr.bf16.gmra.mrb[0].mxu0 %v28
  %v171 = vpop.f32.mrb[0].mxu0
  %v172 = vadd.f32 %v130, %v171
  %v173 = vpop.f32.mrb[0].mxu0
  %v174 = vadd.f32 %v134, %v173
  %v175 = vpop.f32.mrb[0].mxu0
  %v176 = vpop.f32.mrb[0].mxu0
  %177 = vdwg.mxu0
  %v178 = vmax.f32 %v172, 0.0
  %v179 = vmax.f32 %v174, 0.0
  %v180 = vpack.c.bf16 %v178, %v178
  %v181 = vpack.c.bf16 %v179, %v179
  %v182 = vld [vmem:[%s3] sm:$0xff]
  %v183 = vld [vmem:[%s3 + $0x8] sm:$0xff]
  %v184 = vld [vmem:[%s3 + $0x10] sm:$0xff]
  %v185 = vld [vmem:[%s3 + $0x18] sm:$0xff]
  %v186 = vld [vmem:[%s3 + $0x20] sm:$0xff]
  %v187 = vld [vmem:[%s3 + $0x28] sm:$0xff]
  %v188 = vld [vmem:[%s3 + $0x30] sm:$0xff]
  %v189 = vld [vmem:[%s3 + $0x38] sm:$0xff]
  %v190 = vld [vmem:[%s3 + $0x40] sm:$0xff]
  %v191 = vld [vmem:[%s3 + $0x48] sm:$0xff]
  %v192 = vld [vmem:[%s3 + $0x50] sm:$0xff]
  %v193 = vld [vmem:[%s3 + $0x58] sm:$0xff]
  %v194 = vld [vmem:[%s3 + $0x60] sm:$0xff]
  %v195 = vld [vmem:[%s3 + $0x68] sm:$0xff]
  %v196 = vld [vmem:[%s3 + $0x70] sm:$0xff]
  %v197 = vld [vmem:[%s3 + $0x78] sm:$0xff]
  %v198 = vld [vmem:[%s3 + $0x80] sm:$0xff]
  %v199 = vld [vmem:[%s3 + $0x88] sm:$0xff]
  %v200 = vld [vmem:[%s3 + $0x90] sm:$0xff]
  %v201 = vld [vmem:[%s3 + $0x98] sm:$0xff]
  %v202 = vld [vmem:[%s3 + $0xa0] sm:$0xff]
  %v203 = vld [vmem:[%s3 + $0xa8] sm:$0xff]
  %v204 = vld [vmem:[%s3 + $0xb0] sm:$0xff]
  %v205 = vld [vmem:[%s3 + $0xb8] sm:$0xff]
  %v206 = vld [vmem:[%s4] sm:$0x3]
  %v231 = vunpack.c.l.b16 %v182
  %v232 = vunpack.c.h.b16 %v182
  %v233 = vunpack.c.l.b16 %v183
  %v234 = vunpack.c.h.b16 %v183
  %v235 = vunpack.c.l.b16 %v184
  %v236 = vunpack.c.h.b16 %v184
  %v237 = vunpack.c.l.b16 %v185
  %v238 = vunpack.c.h.b16 %v185
  %v239 = vunpack.c.l.b16 %v186
  %v240 = vunpack.c.h.b16 %v186
  %v241 = vunpack.c.l.b16 %v187
  %v242 = vunpack.c.h.b16 %v187
  %v243 = vunpack.c.l.b16 %v188
  %v244 = vunpack.c.h.b16 %v188
  %v245 = vunpack.c.l.b16 %v189
  %v246 = vunpack.c.h.b16 %v189
  %v247 = vunpack.c.l.b16 %v190
  %v248 = vunpack.c.h.b16 %v190
  %v249 = vunpack.c.l.b16 %v191
  %v250 = vunpack.c.h.b16 %v191
  %v251 = vunpack.c.l.b16 %v192
  %v252 = vunpack.c.h.b16 %v192
  %v253 = vunpack.c.l.b16 %v193
  %v254 = vunpack.c.h.b16 %v193
  %v255 = vunpack.c.l.b16 %v194
  %v256 = vunpack.c.h.b16 %v194
  %v257 = vunpack.c.l.b16 %v195
  %v258 = vunpack.c.h.b16 %v195
  %v259 = vunpack.c.l.b16 %v196
  %v260 = vunpack.c.h.b16 %v196
  %v261 = vunpack.c.l.b16 %v197
  %v262 = vunpack.c.h.b16 %v197
  %v263 = vunpack.c.l.b16 %v198
  %v264 = vunpack.c.h.b16 %v198
  %v265 = vunpack.c.l.b16 %v199
  %v266 = vunpack.c.h.b16 %v199
  %v267 = vunpack.c.l.b16 %v200
  %v268 = vunpack.c.h.b16 %v200
  %v269 = vunpack.c.l.b16 %v201
  %v270 = vunpack.c.h.b16 %v201
  %v271 = vunpack.c.l.b16 %v202
  %v272 = vunpack.c.h.b16 %v202
  %v273 = vunpack.c.l.b16 %v203
  %v274 = vunpack.c.h.b16 %v203
  %v275 = vunpack.c.l.b16 %v204
  %v276 = vunpack.c.h.b16 %v204
  %v277 = vunpack.c.l.b16 %v205
  %v278 = vunpack.c.h.b16 %v205
  %v279 = vpack.c.b16 %v233, %v231
  %v280 = vpack.c.b16 %v234, %v232
  %v281 = vpack.c.b16 %v237, %v235
  %v282 = vpack.c.b16 %v238, %v236
  %v283 = vpack.c.b16 %v241, %v239
  %v284 = vpack.c.b16 %v242, %v240
  %v285 = vpack.c.b16 %v245, %v243
  %v286 = vpack.c.b16 %v246, %v244
  %v287 = vpack.c.b16 %v249, %v247
  %v288 = vpack.c.b16 %v250, %v248
  %v289 = vpack.c.b16 %v253, %v251
  %v290 = vpack.c.b16 %v254, %v252
  %v291 = vpack.c.b16 %v257, %v255
  %v292 = vpack.c.b16 %v258, %v256
  %v293 = vpack.c.b16 %v261, %v259
  %v294 = vpack.c.b16 %v262, %v260
  %v295 = vpack.c.b16 %v265, %v263
  %v296 = vpack.c.b16 %v266, %v264
  %v297 = vpack.c.b16 %v269, %v267
  %v298 = vpack.c.b16 %v270, %v268
  %v299 = vpack.c.b16 %v273, %v271
  %v300 = vpack.c.b16 %v274, %v272
  %v301 = vpack.c.b16 %v277, %v275
  %v302 = vpack.c.b16 %v278, %v276
  %v328 = vlaneseq
  %v329 = vshrl.u32 %v328, 7
  %v330 = vsub.s32 0, %v329
  %v331 = vrot.slane %v206, %v330
  %v332 = vlaneseq
  %v333 = vshrl.u32 %v332, 7
  %v334 = vsub.s32 1, %v333
  %v335 = vrot.slane %v206, %v334
  %vm338 = vcmask 523264
  %v340 = vsel %vm338, %v181, 0
  %342 = vmatprep.subr.bf16.mxu0 %v280
  %343 = vmatpush1.bf16.msra.mxu0 %v279
  %344 = vmatprep.subr.bf16.mxu0 %v282
  %345 = vmatpush1.bf16.msra.mxu0 %v281
  %346 = vmatprep.subr.bf16.mxu0 %v284
  %347 = vmatpush1.bf16.msra.mxu0 %v283
  %348 = vmatprep.subr.bf16.mxu0 %v286
  %349 = vmatpush1.bf16.msra.mxu0 %v285
  %350 = vmatprep.subr.bf16.mxu0 %v288
  %351 = vmatpush1.bf16.msra.mxu0 %v287
  %352 = vmatprep.subr.bf16.mxu0 %v290
  %353 = vmatpush1.bf16.msra.mxu0 %v289
  %354 = vmatprep.subr.bf16.mxu0 %v292
  %355 = vmatpush1.bf16.msra.mxu0 %v291
  %356 = vmatprep.subr.bf16.mxu0 %v294
  %357 = vmatpush1.bf16.msra.mxu0 %v293
  %358 = vmatprep.subr.bf16.mxu0 %v296
  %359 = vmatpush1.bf16.msra.mxu0 %v295
  %360 = vmatprep.subr.bf16.mxu0 %v298
  %361 = vmatpush1.bf16.msra.mxu0 %v297
  %362 = vmatprep.subr.bf16.mxu0 %v300
  %363 = vmatpush1.bf16.msra.mxu0 %v299
  %364 = vmatprep.subr.bf16.mxu0 %v302
  %365 = vmatpush1.bf16.msra.mxu0 %v301
  %366 = vmatprep.subr.bf16.mxu0 0
  %367 = vmatpush1.bf16.msra.mxu0 0
  %368 = vmatprep.subr.bf16.mxu0 0
  %369 = vmatpush1.bf16.msra.mxu0 0
  %370 = vmatprep.subr.bf16.mxu0 0
  %371 = vmatpush1.bf16.msra.mxu0 0
  %372 = vmatprep.subr.bf16.mxu0 0
  %373 = vmatpush1.bf16.msra.mxu0 0
  %374 = vmatprep.mubr.bf16.mxu0 %v340
  %375 = vmatmul.mubr.bf16.gmra.mrb[0].mxu0 %v180
  %v376 = vpop.f32.mrb[0].mxu0
  %v377 = vadd.f32 %v331, %v376
  %v378 = vpop.f32.mrb[0].mxu0
  %v379 = vadd.f32 %v335, %v378
  %v380 = vpop.f32.mrb[0].mxu0
  %v381 = vpop.f32.mrb[0].mxu0
  %382 = vdwg.mxu0
  %v383 = vmax.f32 %v377, 0.0
  %v384 = vmax.f32 %v379, 0.0
  %v385 = vpack.c.bf16 %v383, %v383
  %v386 = vpack.c.bf16 %v384, %v384
  %v387 = vld [vmem:[%s5] sm:$0xf]
  %v388 = vld [vmem:[%s5 + $0x4] sm:$0xf]
  %v389 = vld [vmem:[%s5 + $0x8] sm:$0xf]
  %v390 = vld [vmem:[%s5 + $0xc] sm:$0xf]
  %v391 = vld [vmem:[%s5 + $0x10] sm:$0xf]
  %v392 = vld [vmem:[%s5 + $0x14] sm:$0xf]
  %v393 = vld [vmem:[%s5 + $0x18] sm:$0xf]
  %v394 = vld [vmem:[%s5 + $0x1c] sm:$0xf]
  %v395 = vld [vmem:[%s5 + $0x20] sm:$0xf]
  %v396 = vld [vmem:[%s5 + $0x24] sm:$0xf]
  %v397 = vld [vmem:[%s5 + $0x28] sm:$0xf]
  %v398 = vld [vmem:[%s5 + $0x2c] sm:$0xf]
  %v399 = vld [vmem:[%s5 + $0x30] sm:$0xf]
  %v400 = vld [vmem:[%s5 + $0x34] sm:$0xf]
  %v401 = vld [vmem:[%s5 + $0x38] sm:$0xf]
  %v402 = vld [vmem:[%s5 + $0x3c] sm:$0xf]
  %v403 = vld [vmem:[%s5 + $0x40] sm:$0xf]
  %v404 = vld [vmem:[%s5 + $0x44] sm:$0xf]
  %v405 = vld [vmem:[%s5 + $0x48] sm:$0xf]
  %v406 = vld [vmem:[%s5 + $0x4c] sm:$0xf]
  %v407 = vld [vmem:[%s5 + $0x50] sm:$0xf]
  %v408 = vld [vmem:[%s5 + $0x54] sm:$0xf]
  %v409 = vld [vmem:[%s5 + $0x58] sm:$0xf]
  %v410 = vld [vmem:[%s5 + $0x5c] sm:$0xf]
  %v411 = vld [vmem:[%s6] sm:$0x1]
  %v436 = vunpack.c.l.b16 %v387
  %v437 = vunpack.c.l.b16 %v388
  %v438 = vunpack.c.l.b16 %v389
  %v439 = vunpack.c.l.b16 %v390
  %v440 = vunpack.c.l.b16 %v391
  %v441 = vunpack.c.l.b16 %v392
  %v442 = vunpack.c.l.b16 %v393
  %v443 = vunpack.c.l.b16 %v394
  %v444 = vunpack.c.l.b16 %v395
  %v445 = vunpack.c.l.b16 %v396
  %v446 = vunpack.c.l.b16 %v397
  %v447 = vunpack.c.l.b16 %v398
  %v448 = vunpack.c.l.b16 %v399
  %v449 = vunpack.c.l.b16 %v400
  %v450 = vunpack.c.l.b16 %v401
  %v451 = vunpack.c.l.b16 %v402
  %v452 = vunpack.c.l.b16 %v403
  %v453 = vunpack.c.l.b16 %v404
  %v454 = vunpack.c.l.b16 %v405
  %v455 = vunpack.c.l.b16 %v406
  %v456 = vunpack.c.l.b16 %v407
  %v457 = vunpack.c.l.b16 %v408
  %v458 = vunpack.c.l.b16 %v409
  %v459 = vunpack.c.l.b16 %v410
  %v460 = vpack.c.b16 %v437, %v436
  %v461 = vpack.c.b16 %v439, %v438
  %v462 = vpack.c.b16 %v441, %v440
  %v463 = vpack.c.b16 %v443, %v442
  %v464 = vpack.c.b16 %v445, %v444
  %v465 = vpack.c.b16 %v447, %v446
  %v466 = vpack.c.b16 %v449, %v448
  %v467 = vpack.c.b16 %v451, %v450
  %v468 = vpack.c.b16 %v453, %v452
  %v469 = vpack.c.b16 %v455, %v454
  %v470 = vpack.c.b16 %v457, %v456
  %v471 = vpack.c.b16 %v459, %v458
  %v485 = vsel %vm338, %v386, 0
  %487 = vmatprep.subr.bf16.mxu0 0
  %488 = vmatpush1.bf16.msra.mxu0 %v460
  %489 = vmatprep.subr.bf16.mxu0 0
  %490 = vmatpush1.bf16.msra.mxu0 %v461
  %491 = vmatprep.subr.bf16.mxu0 0
  %492 = vmatpush1.bf16.msra.mxu0 %v462
  %493 = vmatprep.subr.bf16.mxu0 0
  %494 = vmatpush1.bf16.msra.mxu0 %v463
  %495 = vmatprep.subr.bf16.mxu0 0
  %496 = vmatpush1.bf16.msra.mxu0 %v464
  %497 = vmatprep.subr.bf16.mxu0 0
  %498 = vmatpush1.bf16.msra.mxu0 %v465
  %499 = vmatprep.subr.bf16.mxu0 0
  %500 = vmatpush1.bf16.msra.mxu0 %v466
  %501 = vmatprep.subr.bf16.mxu0 0
  %502 = vmatpush1.bf16.msra.mxu0 %v467
  %503 = vmatprep.subr.bf16.mxu0 0
  %504 = vmatpush1.bf16.msra.mxu0 %v468
  %505 = vmatprep.subr.bf16.mxu0 0
  %506 = vmatpush1.bf16.msra.mxu0 %v469
  %507 = vmatprep.subr.bf16.mxu0 0
  %508 = vmatpush1.bf16.msra.mxu0 %v470
  %509 = vmatprep.subr.bf16.mxu0 0
  %510 = vmatpush1.bf16.msra.mxu0 %v471
  %511 = vmatprep.subr.bf16.mxu0 0
  %512 = vmatpush1.bf16.msra.mxu0 0
  %513 = vmatprep.subr.bf16.mxu0 0
  %514 = vmatpush1.bf16.msra.mxu0 0
  %515 = vmatprep.subr.bf16.mxu0 0
  %516 = vmatpush1.bf16.msra.mxu0 0
  %517 = vmatprep.subr.bf16.mxu0 0
  %518 = vmatpush1.bf16.msra.mxu0 0
  %519 = vmatprep.mubr.bf16.mxu0 %v485
  %520 = vmatmul.mubr.bf16.gmra.mrb[0].mxu0 %v385
  %v521 = vpop.f32.mrb[0].mxu0
  %v522 = vadd.f32 %v411, %v521
  %v523 = vpop.f32.mrb[0].mxu0
  %v524 = vpop.f32.mrb[0].mxu0
  %v525 = vpop.f32.mrb[0].mxu0
  %526 = vdwg.mxu0
  %v527 = vtanh.pop %v522
  %v528 = vmul.f32 %v527, 2.0
  %vm529 = vcmask 253952
  %530 = vst.msk [vmem:[%s7] sm:$0x1] %vm529, %v528
  // Predicated region
  $region30: #{actor_forward.1} parent=0 // pred_check
    _
  $region31: #{actor_forward.1} parent=0 // pred_check_branch
    %532 = sbr.rel (0) target = $region33
  $region32: #{actor_forward.1} parent=0 // pred_region
    _
  $region33: #{actor_forward.1} parent=0 // pred_fallthru
    _
  // Predicated region
  $region34: #{actor_forward.1} parent=0 // pred_check
    _
  $region35: #{actor_forward.1} parent=0 // pred_check_branch
    %534 = sbr.rel (0) target = $region37
  $region36: #{actor_forward.1} parent=0 // pred_region
    _
  $region37: #{actor_forward.1} parent=0 // pred_fallthru
    _

</llo_original>
